<compile_context>
chip_gen: v6e
topology: v6e:2x2x1
jax: 0.10.0
libtpu: 0.0.40
codegen_flags: <defaults>
</compile_context>

<pallas_src>
import functools

import jax
import jax.numpy as jnp
import numpy as np
from jax import lax
from jax.experimental import pallas as pl
from jax.experimental.pallas import tpu as pltpu

EPS = 1e-5


def _layernorm_kernel(x_ref, w_ref, b_ref, o_ref, *, eps):
    # x_ref: (TM, D) in native dtype; cast in-kernel (cheap, VPU) instead of
    # materializing an f32 copy in HBM from the wrapper.
    x = x_ref[...].astype(jnp.float32)                       # (TM, D)
    mu = jnp.mean(x, axis=-1, keepdims=True)                 # (TM, 1)
    xc = x - mu
    var = jnp.mean(xc * xc, axis=-1, keepdims=True)          # unbiased=False
    inv = lax.rsqrt(var + eps)                               # EUP
    y = xc * inv
    w = w_ref[...].astype(jnp.float32)                       # (1, D)
    b = b_ref[...].astype(jnp.float32)                       # (1, D)
    o_ref[...] = (y * w + b).astype(o_ref.dtype)


def with_bias_layernorm(x, weight, bias, *, eps=EPS, block_rows=None):
    """LayerNorm over the last dim with affine weight/bias (WithBias_LayerNorm)."""
    orig_shape = x.shape
    D = orig_shape[-1]
    assert weight.shape == (D,) and bias.shape == (D,)

    N = 1
    for s in orig_shape[:-1]:
        N *= int(s)
    N = max(N, 1)

    x2 = x.reshape(N, D)
    w2 = weight.reshape(1, D)
    b2 = bias.reshape(1, D)

    if block_rows is None:
        # Large row blocks to amortize per-step overhead; keep the
        # double-buffered input+output tiles comfortably small (<~8 MiB total)
        # so pipelining survives on v7x's reduced VMEM.
        bytes_per_row = D * max(np.dtype(x.dtype).itemsize, 4)
        max_rows_by_vmem = max(8, (4 * 1024 * 1024) // max(bytes_per_row, 1))
        block_rows = min(N, 1024, max_rows_by_vmem)
    TM = min(block_rows, N)
    if TM < N:
        TM = max(8, (TM // 8) * 8)   # (8,128) tiling rule on the sublane axis
    grid = (pl.cdiv(N, TM),)

    out = pl.pallas_call(
        functools.partial(_layernorm_kernel, eps=eps),
        out_shape=jax.ShapeDtypeStruct((N, D), x.dtype),
        grid_spec=pltpu.PrefetchScalarGridSpec(
            num_scalar_prefetch=0,
            grid=grid,
            in_specs=[
                pl.BlockSpec((TM, D), lambda i: (i, 0)),   # x rows
                pl.BlockSpec((1, D), lambda i: (0, 0)),    # weight (resident)
                pl.BlockSpec((1, D), lambda i: (0, 0)),    # bias   (resident)
            ],
            out_specs=pl.BlockSpec((TM, D), lambda i: (i, 0)),
        ),
        compiler_params=pltpu.CompilerParams(
            dimension_semantics=("parallel",)),
    )(x2, w2, b2)
    return out.reshape(orig_shape)


def reference_layernorm(x, weight, bias, eps=EPS):
    """Pure-JAX reference mirroring torch WithBias_LayerNorm.forward."""
    x32 = x.astype(jnp.float32)
    mu = jnp.mean(x32, axis=-1, keepdims=True)
    var = jnp.mean((x32 - mu) ** 2, axis=-1, keepdims=True)
    y = (x32 - mu) / jnp.sqrt(var + eps)
    out = y * weight.astype(jnp.float32) + bias.astype(jnp.float32)
    return out.astype(x.dtype)


if __name__ == "__main__":
    key = jax.random.PRNGKey(0)
    kx, kw, kb, kx2 = jax.random.split(key, 4)

    # Small shapes consistent with the module: (batch=2, seq=8, hidden=32).
    D = 32
    x = jax.random.normal(kx, (2, 8, D), jnp.float32)
    weight = 1.0 + 0.1 * jax.random.normal(kw, (D,), jnp.float32)
    bias = 0.1 * jax.random.normal(kb, (D,), jnp.float32)

    out = jax.block_until_ready(with_bias_layernorm(x, weight, bias))
    ref = jax.block_until_ready(reference_layernorm(x, weight, bias))
    assert out.shape == x.shape
    assert np.allclose(np.asarray(out), np.asarray(ref), rtol=1e-5, atol=1e-5), (
        float(np.max(np.abs(np.asarray(out) - np.asarray(ref)))))

    # Multi-block + ragged last block path (N=200 rows, TM=64 -> grid=4).
    x_big = jax.random.normal(kx2, (2, 100, D), jnp.float32)
    out_b = jax.block_until_ready(
        with_bias_layernorm(x_big, weight, bias, block_rows=64))
    ref_b = jax.block_until_ready(reference_layernorm(x_big, weight, bias))
    assert np.allclose(np.asarray(out_b), np.asarray(ref_b), rtol=1e-5, atol=1e-5)

    # Native low-precision input: cast happens in-kernel (halved HBM traffic).
    x_bf16 = x_big.astype(jnp.bfloat16)
    out_bf = jax.block_until_ready(with_bias_layernorm(x_bf16, weight, bias))
    ref_bf = jax.block_until_ready(reference_layernorm(x_bf16, weight, bias))
    assert np.allclose(np.asarray(out_bf, dtype=np.float32),
                       np.asarray(ref_bf, dtype=np.float32),
                       rtol=2e-2, atol=2e-2)

    print("KERNEL_OK")
</pallas_src>

<mosaic_0001>
module attributes {stable_mosaic.version = 11 : i64} {
  func.func @_layernorm_kernel(%arg0: i32, %arg1: memref<16x32xf32, #tpu.memory_space<vmem>>, %arg2: memref<1x32xf32, #tpu.memory_space<vmem>>, %arg3: memref<1x32xf32, #tpu.memory_space<vmem>>, %arg4: memref<16x32xf32, #tpu.memory_space<vmem>>) attributes {dimension_semantics = [#tpu.dimension_semantics<parallel>], iteration_bounds = array<i64: 1>, scalar_prefetch = 0 : i64, scratch_operands = 0 : i64, tpu.core_type = #tpu.core_type<tc>, window_params = [{transform_indices = @transform_0, window_bounds = array<i64: 16, 32>}, {pipeline_mode = #tpu.pipeline_mode<synchronous>, transform_indices = @transform_1, window_bounds = array<i64: 1, 32>}, {pipeline_mode = #tpu.pipeline_mode<synchronous>, transform_indices = @transform_2, window_bounds = array<i64: 1, 32>}, {transform_indices = @transform_3, window_bounds = array<i64: 16, 32>}]} {
    %c0 = arith.constant 0 : index
    %c0_0 = arith.constant 0 : index
    %0 = vector.load %arg1[%c0, %c0_0] : memref<16x32xf32, #tpu.memory_space<vmem>>, vector<16x32xf32>
    %cst = arith.constant dense<0.000000e+00> : vector<16xf32>
    %1 = vector.multi_reduction <add>, %0, %cst [1] : vector<16x32xf32> to vector<16xf32>
    %2 = vector.shape_cast %1 : vector<16xf32> to vector<16x1xf32>
    %cst_1 = arith.constant 3.200000e+01 : f32
    %3 = vector.broadcast %cst_1 : f32 to vector<16x1xf32>
    %4 = arith.divf %2, %3 : vector<16x1xf32>
    %5 = vector.broadcast %4 : vector<16x1xf32> to vector<16x32xf32>
    %6 = arith.subf %0, %5 : vector<16x32xf32>
    %7 = arith.mulf %6, %6 : vector<16x32xf32>
    %cst_2 = arith.constant dense<0.000000e+00> : vector<16xf32>
    %8 = vector.multi_reduction <add>, %7, %cst_2 [1] : vector<16x32xf32> to vector<16xf32>
    %9 = vector.shape_cast %8 : vector<16xf32> to vector<16x1xf32>
    %cst_3 = arith.constant 3.200000e+01 : f32
    %10 = vector.broadcast %cst_3 : f32 to vector<16x1xf32>
    %11 = arith.divf %9, %10 : vector<16x1xf32>
    %cst_4 = arith.constant 9.99999974E-6 : f32
    %12 = vector.broadcast %cst_4 : f32 to vector<16x1xf32>
    %13 = arith.addf %11, %12 : vector<16x1xf32>
    %14 = math.rsqrt %13 : vector<16x1xf32>
    %15 = vector.broadcast %14 : vector<16x1xf32> to vector<16x32xf32>
    %16 = arith.mulf %6, %15 : vector<16x32xf32>
    %c0_5 = arith.constant 0 : index
    %c0_6 = arith.constant 0 : index
    %17 = vector.load %arg2[%c0_5, %c0_6] : memref<1x32xf32, #tpu.memory_space<vmem>>, vector<1x32xf32>
    %c0_7 = arith.constant 0 : index
    %c0_8 = arith.constant 0 : index
    %18 = vector.load %arg3[%c0_7, %c0_8] : memref<1x32xf32, #tpu.memory_space<vmem>>, vector<1x32xf32>
    %19 = vector.broadcast %17 : vector<1x32xf32> to vector<16x32xf32>
    %20 = arith.mulf %16, %19 : vector<16x32xf32>
    %21 = vector.broadcast %18 : vector<1x32xf32> to vector<16x32xf32>
    %22 = arith.addf %20, %21 : vector<16x32xf32>
    %c0_9 = arith.constant 0 : index
    %c0_10 = arith.constant 0 : index
    %23 = vector.load %arg4[%c0_9, %c0_10] : memref<16x32xf32, #tpu.memory_space<vmem>>, vector<16x32xf32>
    tpu.vector_store %arg4[%c0_9, %c0_10], %22 {strides = array<i32>} : memref<16x32xf32, #tpu.memory_space<vmem>>, vector<16x32xf32>,
    return
  }
  func.func @transform_0(%arg0: i32) -> (i32, i32) {
    %c0_i32 = arith.constant 0 : i32
    %c0_i32_0 = arith.constant 0 : i32
    return %arg0, %c0_i32 : i32, i32
  }
  func.func @transform_1(%arg0: i32) -> (i32, i32) {
    %c0_i32 = arith.constant 0 : i32
    %c0_i32_0 = arith.constant 0 : i32
    %c0_i32_1 = arith.constant 0 : i32
    return %c0_i32, %c0_i32_0 : i32, i32
  }
  func.func @transform_2(%arg0: i32) -> (i32, i32) {
    %c0_i32 = arith.constant 0 : i32
    %c0_i32_0 = arith.constant 0 : i32
    %c0_i32_1 = arith.constant 0 : i32
    return %c0_i32, %c0_i32_0 : i32, i32
  }
  func.func @transform_3(%arg0: i32) -> (i32, i32) {
    %c0_i32 = arith.constant 0 : i32
    %c0_i32_0 = arith.constant 0 : i32
    return %arg0, %c0_i32 : i32, i32
  }
}

</mosaic_0001>

<llo_original>
// kernel: tpu_custom_call.1
$region0: #{tpu_custom_call.1}
  #allocation0 [shape = 'u32[]', space=smem, size = 0x4, offset = 0x4, fixed_abs, tag = 'smem constant byte address 0x4 - core index']
  #allocation1 [shape = 'u32[144,128]{1,0:T(1,128)}', space=vmem, size = 0x12000, scoped, tag = 'internal scratch']
  %s0 = inlined_call_operand.hbm [shape: f32[16,32], index: 0, kind: input, shape index: {}]
  %s1 = inlined_call_operand.vmem [shape: f32[1,32], index: 1, kind: input, shape index: {}]
  %s2 = inlined_call_operand.vmem [shape: f32[1,32], index: 2, kind: input, shape index: {}]
  %s3 = inlined_call_operand.hbm [shape: f32[16,32], index: 3, kind: output, shape index: {}]
  %s4 = sld [smem:[#allocation0]]
  $region26: #{tpu_custom_call.1} parent=0
    _
  %s6 = ssub.s32 1, %s4
  %s7 = scalar_select 0, %s6, %s4
  $region1: #{tpu_custom_call.1} parent=0
    #allocation2 [shape = 'u8[8192]{0}', space=vmem, size = 0x2000, scoped, tag = 'input window, operand 0, single buffered']
    #allocation3 [shape = 's32[1]{0}', space=sflag, size = 0x4, scoped, tag = 'scoped memory for tpu_custom_call.1']
    #allocation4 [shape = 's32[1]{0}', space=sflag, size = 0x4, scoped, tag = 'scoped memory for tpu_custom_call.1']
    #allocation5 [shape = 'u8[8192]{0}', space=vmem, size = 0x2000, scoped, tag = 'output window, operand 0, single buffered']
    %8 = vsyncpa [#allocation3], 0
    %9 = vsyncpa [#allocation4], 0
    // Predicated region
    $region2: #{tpu_custom_call.1} parent=1 // pred_check
      _
    $region3: #{tpu_custom_call.1} parent=1 // pred_check_branch
      %11 = sbr.rel (0) target = $region5
    $region4: #{tpu_custom_call.1} parent=1 // pred_region
      %s13 = ssub.s32 256, 256
      %14 = vsyncadd [#allocation3], %s13
      %s15 = sshll.u32 [#allocation2], 4
      %s16 = int_to_ptr.vmem [resolvable:$true] %s15
      %21 = dma.hbm_to_vmem [thread:$0]  %s0, 256, %s16, [#allocation3], 128, 128, 8
    $region5: #{tpu_custom_call.1} parent=1 // pred_fallthru
      _
    // Predicated region
    $region6: #{tpu_custom_call.1} parent=1 // pred_check
      _
    $region7: #{tpu_custom_call.1} parent=1 // pred_check_branch
      %23 = sbr.rel (0) target = $region9
    $region8: #{tpu_custom_call.1} parent=1 // pred_region
      _
    $region9: #{tpu_custom_call.1} parent=1 // pred_fallthru
      _
    // Predicated region
    $region10: #{tpu_custom_call.1} parent=1 // pred_check
      _
    $region11: #{tpu_custom_call.1} parent=1 // pred_check_branch
      %25 = sbr.rel (0) target = $region13
    $region12: #{tpu_custom_call.1} parent=1 // pred_region
      _
    $region13: #{tpu_custom_call.1} parent=1 // pred_fallthru
      _
    // Predicated region
    $region14: #{tpu_custom_call.1} parent=1 // pred_check
      _
    $region15: #{tpu_custom_call.1} parent=1 // pred_check_branch
      %27 = sbr.rel (0) target = $region17
    $region16: #{tpu_custom_call.1} parent=1 // pred_region
      %28 = dma.done [#allocation3], 256
    $region17: #{tpu_custom_call.1} parent=1 // pred_fallthru
      _
    %v29 = vld [vmem:[#allocation2] sm:$0xff]
    %v30 = vld [vmem:[#allocation2 + $0x8] sm:$0xff]
    %vm31 = vcmask 261120
    %v32 = vsel %vm31, %v29, 0.0
    %33 = vadd.xlane.f32.xlu0 %v32
    %v34 = vpop.xlane.xlu0 %33
    %v35 = vsel %vm31, %v30, 0.0
    %36 = vadd.xlane.f32.xlu0 %v35
    %v37 = vpop.xlane.xlu0 %36
    %v38 = vrcp.pop 32.0
    %v39 = vmul.f32 %v34, %v38
    %v40 = vmul.f32 %v37, %v38
    %v41 = vsub.f32 %v29, %v39
    %v42 = vsub.f32 %v30, %v40
    %v43 = vmul.f32 %v41, %v41
    %v44 = vmul.f32 %v42, %v42
    %v45 = vsel %vm31, %v43, 0.0
    %46 = vadd.xlane.f32.xlu0 %v45
    %v47 = vpop.xlane.xlu0 %46
    %v48 = vsel %vm31, %v44, 0.0
    %49 = vadd.xlane.f32.xlu0 %v48
    %v50 = vpop.xlane.xlu0 %49
    %v51 = vmul.f32 %v47, %v38
    %v52 = vmul.f32 %v50, %v38
    %v53 = vadd.f32 %v51, 1e-05
    %v54 = vadd.f32 %v52, 1e-05
    %v55 = vrsqrt.pop %v53
    %v56 = vrsqrt.pop %v54
    %v57 = vmul.f32 %v41, %v55
    %v58 = vmul.f32 %v42, %v56
    %v59 = vld [vmem:[%s1] sm:$0x1]
    %v60 = vld [vmem:[%s2] sm:$0x1]
    %v62 = vlaneseq
    %v63 = vshrl.u32 %v62, 7
    %v64 = vsub.s32 0, %v63
    %v65 = vrot.slane %v59, %v64
    %v67 = vmul.f32 %v57, %v65
    %v68 = vmul.f32 %v58, %v65
    %v70 = vlaneseq
    %v71 = vshrl.u32 %v70, 7
    %v72 = vsub.s32 0, %v71
    %v73 = vrot.slane %v60, %v72
    %v75 = vadd.f32 %v67, %v73
    %v76 = vadd.f32 %v68, %v73
    %77 = vst.msk [vmem:[#allocation5] sm:$0xff] %vm31, %v75
    %78 = vst.msk [vmem:[#allocation5 + $0x8] sm:$0xff] %vm31, %v76
    // Predicated region
    $region18: #{tpu_custom_call.1} parent=1 // pred_check
      _
    $region19: #{tpu_custom_call.1} parent=1 // pred_check_branch
      %80 = sbr.rel (0) target = $region21
    $region20: #{tpu_custom_call.1} parent=1 // pred_region
      %s82 = ssub.s32 256, 256
      %83 = vsyncadd [#allocation4], %s82
      %s84 = sshll.u32 [#allocation5], 4
      %s85 = int_to_ptr.vmem [resolvable:$true] %s84
      %90 = dma.vmem_to_hbm [thread:$0]  %s85, 256, %s3, [#allocation4], 128, 128, 8
    $region21: #{tpu_custom_call.1} parent=1 // pred_fallthru
      _
    // Predicated region
    $region22: #{tpu_custom_call.1} parent=1 // pred_check
      _
    $region23: #{tpu_custom_call.1} parent=1 // pred_check_branch
      %92 = sbr.rel (0) target = $region25
    $region24: #{tpu_custom_call.1} parent=1 // pred_region
      %93 = dma.done [#allocation4], 256
    $region25: #{tpu_custom_call.1} parent=1 // pred_fallthru
      _
    %94 = vsyncpa [#allocation3], 1
    %95 = vsyncpa [#allocation4], 1

</llo_original>
